<compile_context>
chip_gen: v5e
topology: v5e:2x2
jax: 0.10.0
libtpu: 0.0.40
codegen_flags: <defaults>
</compile_context>

<pallas_src>
import functools

import jax
import jax.numpy as jnp
from jax.experimental import pallas as pl
from jax.experimental.pallas import tpu as pltpu


# ----------------------------------------------------------------------------
# Kernels
# ----------------------------------------------------------------------------

def _make_linear_kernel(use_bias: bool, use_scratch: bool):
    """Build a tiled-matmul kernel body.

    Refs (in order): x (tm,tk), w (tk,tn) [pre-transposed], [bias (1,tn)],
    o (tm,tn), [acc (tm,tn) f32 scratch].  Grid = (M/tm, N/tn, K/tk) with the
    reduction axis K last ("arbitrary"); the output / accumulator tile is
    resident across K.
    """
    if use_scratch:
        if use_bias:
            def kernel(x_ref, w_ref, b_ref, o_ref, acc_ref):
                @pl.when(pl.program_id(2) == 0)
                def _():
                    acc_ref[...] = jnp.zeros_like(acc_ref)

                acc_ref[...] += jnp.dot(x_ref[...], w_ref[...],
                                        preferred_element_type=jnp.float32)

                @pl.when(pl.program_id(2) == pl.num_programs(2) - 1)
                def _():
                    o_ref[...] = (acc_ref[...] +
                                  b_ref[...].astype(jnp.float32)
                                  ).astype(o_ref.dtype)
        else:
            def kernel(x_ref, w_ref, o_ref, acc_ref):
                @pl.when(pl.program_id(2) == 0)
                def _():
                    acc_ref[...] = jnp.zeros_like(acc_ref)

                acc_ref[...] += jnp.dot(x_ref[...], w_ref[...],
                                        preferred_element_type=jnp.float32)

                @pl.when(pl.program_id(2) == pl.num_programs(2) - 1)
                def _():
                    o_ref[...] = acc_ref[...].astype(o_ref.dtype)
    else:
        # Output dtype is f32: accumulate directly into the resident o_ref.
        if use_bias:
            def kernel(x_ref, w_ref, b_ref, o_ref):
                @pl.when(pl.program_id(2) == 0)
                def _():
                    o_ref[...] = jnp.zeros_like(o_ref)

                o_ref[...] += jnp.dot(x_ref[...], w_ref[...],
                                      preferred_element_type=jnp.float32)

                @pl.when(pl.program_id(2) == pl.num_programs(2) - 1)
                def _():
                    o_ref[...] += b_ref[...].astype(o_ref.dtype)
        else:
            def kernel(x_ref, w_ref, o_ref):
                @pl.when(pl.program_id(2) == 0)
                def _():
                    o_ref[...] = jnp.zeros_like(o_ref)

                o_ref[...] += jnp.dot(x_ref[...], w_ref[...],
                                      preferred_element_type=jnp.float32)
    return kernel


# ----------------------------------------------------------------------------
# Tile / VMEM heuristics
# ----------------------------------------------------------------------------

def _round_up(x, m):
    return ((x + m - 1) // m) * m


def _sublane_multiple(dtype):
    # 8 for f32, 16 for bf16, 32 for int8/fp8 (sub-32-bit packs along sublanes)
    return max(8, 32 // jnp.dtype(dtype).itemsize)


def _vmem_capacity_bytes():
    try:
        return int(pltpu.get_tpu_info().vmem_capacity_bytes)
    except Exception:
        return 64 << 20   # conservative default (= v7x per-TC physical)


def _pick_block(dim, candidates, align, max_waste=1.125):
    """Pick a block size from `candidates` (descending) keeping pad waste low."""
    if dim <= align:
        return align
    if dim <= candidates[-1]:
        return _round_up(dim, align)
    for c in candidates:
        if _round_up(dim, c) <= max_waste * dim:
            return c
    # Fall back to the candidate with the least padding.
    return min(candidates, key=lambda c: _round_up(dim, c))


def _pick_tiles(m, n, k, x_dtype):
    vmem_bytes = _vmem_capacity_bytes()
    big_vmem = vmem_bytes >= (100 << 20)      # 128 MiB chips (v5e/v6e) vs 64 MiB (v7x)
    sub = _sublane_multiple(x_dtype)

    # tm: bigger on 128 MiB chips (halves weight re-streaming); sublane-aligned.
    tm_candidates = [512, 256] if big_vmem else [256]
    tm = _pick_block(m, tm_candidates, sub)
    # tn: lane-dense output stores; pick to keep pad waste below ~12%.
    tn = _pick_block(n, [512, 384, 256, 128], 128)
    # tk: 1024 fits comfortably on every chip (double-buffered footprint well
    # under the v7x 64 MiB budget) -> fewer K steps, less accumulator RMW.
    tk = _pick_block(k, [1024, 768, 512, 384, 256, 128], 128)

    # v7x megacore: ensure the parallel M x N grid has >= 2 tiles so both
    # TensorCores get work.
    if not big_vmem:
        while pl.cdiv(m, tm) * pl.cdiv(n, tn) < 2:
            if tn > 128:
                tn = 128 * max(1, (tn // 2) // 128)
            elif tm > sub:
                tm = sub * max(1, (tm // 2) // sub)
            else:
                break

    return tm, tn, tk, vmem_bytes


# ----------------------------------------------------------------------------
# Forward
# ----------------------------------------------------------------------------

@functools.partial(jax.jit, static_argnames=("use_bias",))
def linear_forward(x, weight, bias=None, use_bias=True):
    """y = x @ weight.T + bias, matching torch.nn.Linear semantics.

    x:      (..., in_features)
    weight: (out_features, in_features)   (PyTorch convention)
    bias:   (out_features,) or None
    """
    if use_bias and bias is None:
        raise ValueError("use_bias=True requires a bias array")

    out_features, in_features = weight.shape
    lead_shape = x.shape[:-1]
    m = 1
    for d in lead_shape:
        m *= d
    x2d = x.reshape(m, in_features)

    tm, tn, tk, vmem_bytes = _pick_tiles(m, out_features, in_features, x.dtype)
    mp = _round_up(m, tm)
    np_ = _round_up(out_features, tn)
    kp = _round_up(in_features, tk)

    # Pre-transpose the (static) weight once to (K, N): the per-tile
    # contraction is then the canonical (tm,tk)@(tk,tn) MXU form with no
    # per-K-step in-kernel transpose.
    w_t = weight.T

    # Zero-pad only when needed (zeros contribute nothing to the contraction).
    x_p = (x2d if (mp == m and kp == in_features)
           else jnp.pad(x2d, ((0, mp - m), (0, kp - in_features))))
    w_p = (w_t if (kp == in_features and np_ == out_features)
           else jnp.pad(w_t, ((0, kp - in_features), (0, np_ - out_features))))

    grid = (mp // tm, np_ // tn, kp // tk)

    out_dtype = x.dtype
    acc_in_out = (jnp.dtype(out_dtype) == jnp.dtype(jnp.float32))

    # VMEM budget from the actual (double-buffered) tile footprint, clamped to
    # 75% of physical VMEM (~48 MiB on v7x, ~96 MiB on v5e/v6e).
    xi = jnp.dtype(x.dtype).itemsize
    wi = jnp.dtype(weight.dtype).itemsize
    oi = jnp.dtype(out_dtype).itemsize
    est = 2 * tm * tk * xi + 2 * tk * tn * wi + 2 * tm * tn * oi
    if use_bias:
        est += 2 * tn * jnp.dtype(bias.dtype).itemsize
    if not acc_in_out:
        est += tm * tn * 4
    cap = int(vmem_bytes * 0.75)
    vmem_limit = int(min(max(int(1.5 * est), 32 << 20), cap))

    compiler_params = pltpu.CompilerParams(
        dimension_semantics=("parallel", "parallel", "arbitrary"),
        vmem_limit_bytes=vmem_limit)

    flops = 2 * m * out_features * in_features
    bytes_accessed = (m * in_features * xi
                      + out_features * in_features * wi
                      + m * out_features * oi
                      + (out_features * jnp.dtype(bias.dtype).itemsize
                         if use_bias else 0))
    cost = pl.CostEstimate(flops=flops, transcendentals=0,
                           bytes_accessed=bytes_accessed)

    x_spec = pl.BlockSpec((tm, tk), lambda i, j, k: (i, k))
    w_spec = pl.BlockSpec((tk, tn), lambda i, j, k: (k, j))
    out_spec = pl.BlockSpec((tm, tn), lambda i, j, k: (i, j))
    out_shape = jax.ShapeDtypeStruct((mp, np_), out_dtype)
    scratch = [] if acc_in_out else [pltpu.VMEM((tm, tn), jnp.float32)]

    in_specs = [x_spec, w_spec]
    operands = [x_p, w_p]
    if use_bias:
        b2d = bias.reshape(1, out_features)
        b_p = (b2d if np_ == out_features
               else jnp.pad(b2d, ((0, 0), (0, np_ - out_features))))
        in_specs.append(pl.BlockSpec((1, tn), lambda i, j, k: (0, j)))
        operands.append(b_p)

    kernel = _make_linear_kernel(use_bias, not acc_in_out)

    y2d = pl.pallas_call(
        kernel,
        out_shape=out_shape,
        grid_spec=pltpu.PrefetchScalarGridSpec(
            num_scalar_prefetch=0,
            grid=grid,
            in_specs=in_specs,
            out_specs=out_spec,
            scratch_shapes=scratch),
        compiler_params=compiler_params,
        cost_estimate=cost,
    )(*operands)

    if mp != m or np_ != out_features:
        y2d = y2d[:m, :out_features]
    return y2d.reshape(*lead_shape, out_features)


def init_linear_params(key, in_features, out_features, bias=True,
                       dtype=jnp.float32):
    """Xavier-uniform weight (PyTorch shape (out, in)), zero bias."""
    bound = (6.0 / (in_features + out_features)) ** 0.5
    w = jax.random.uniform(
        key, (out_features, in_features), dtype=dtype,
        minval=-bound, maxval=bound)
    b = jnp.zeros((out_features,), dtype=dtype) if bias else None
    return w, b


if __name__ == "__main__":
    in_features = 32
    out_features = 64
    batch, seq = 2, 8

    key = jax.random.PRNGKey(0)
    k_x, k_w = jax.random.split(key)

    x = jax.random.normal(k_x, (batch, seq, in_features), dtype=jnp.float32)
    weight, bias = init_linear_params(k_w, in_features, out_features, bias=True)

    # Bias path
    y = linear_forward(x, weight, bias, use_bias=True)
    y = jax.block_until_ready(y)
    y_ref = x @ weight.T + bias
    assert y.shape == (batch, seq, out_features)
    assert jnp.allclose(y, y_ref, atol=1e-4, rtol=1e-4)

    # No-bias path
    y_nb = linear_forward(x, weight, None, use_bias=False)
    y_nb = jax.block_until_ready(y_nb)
    y_nb_ref = x @ weight.T
    assert jnp.allclose(y_nb, y_nb_ref, atol=1e-4, rtol=1e-4)

    print("KERNEL_OK")
</pallas_src>

<mosaic_0001>
module attributes {stable_mosaic.version = 11 : i64} {
  func.func @kernel(%arg0: i32, %arg1: i32, %arg2: i32, %arg3: memref<8x128xf32, #tpu.memory_space<vmem>>, %arg4: memref<128x128xf32, #tpu.memory_space<vmem>>, %arg5: memref<1x128xf32, #tpu.memory_space<vmem>>, %arg6: memref<8x128xf32, #tpu.memory_space<vmem>>) attributes {dimension_semantics = [#tpu.dimension_semantics<parallel>, #tpu.dimension_semantics<parallel>, #tpu.dimension_semantics<arbitrary>], iteration_bounds = array<i64: 2, 1, 1>, scalar_prefetch = 0 : i64, scratch_operands = 0 : i64, tpu.core_type = #tpu.core_type<tc>, window_params = [{transform_indices = @transform_0, window_bounds = array<i64: 8, 128>}, {transform_indices = @transform_1, window_bounds = array<i64: 128, 128>}, {transform_indices = @transform_2, window_bounds = array<i64: 1, 128>}, {transform_indices = @transform_3, window_bounds = array<i64: 8, 128>}]} {
    %c0_i32 = arith.constant 0 : i32
    %0 = arith.cmpi eq, %arg2, %c0_i32 : i32
    %1 = arith.extui %0 : i1 to i32
    %c0_i32_0 = arith.constant 0 : i32
    %2 = arith.cmpi ne, %1, %c0_i32_0 : i32
    scf.if %2 {
      %cst_10 = arith.constant 0.000000e+00 : f32
      %12 = vector.broadcast %cst_10 : f32 to vector<8x128xf32>
      %c0_11 = arith.constant 0 : index
      %c0_12 = arith.constant 0 : index
      %13 = vector.load %arg6[%c0_11, %c0_12] : memref<8x128xf32, #tpu.memory_space<vmem>>, vector<8x128xf32>
      tpu.vector_store %arg6[%c0_11, %c0_12], %12 {strides = array<i32>} : memref<8x128xf32, #tpu.memory_space<vmem>>, vector<8x128xf32>,
    } else {
    }
    %c0 = arith.constant 0 : index
    %c0_1 = arith.constant 0 : index
    %3 = vector.load %arg6[%c0, %c0_1] : memref<8x128xf32, #tpu.memory_space<vmem>>, vector<8x128xf32>
    %c0_2 = arith.constant 0 : index
    %c0_3 = arith.constant 0 : index
    %4 = vector.load %arg3[%c0_2, %c0_3] : memref<8x128xf32, #tpu.memory_space<vmem>>, vector<8x128xf32>
    %c0_4 = arith.constant 0 : index
    %c0_5 = arith.constant 0 : index
    %5 = vector.load %arg4[%c0_4, %c0_5] : memref<128x128xf32, #tpu.memory_space<vmem>>, vector<128x128xf32>
    %cst = arith.constant dense<0.000000e+00> : vector<8x128xf32>
    %6 = tpu.matmul %4, %5, %cst {dimension_numbers = #tpu.dot_dimension_numbers<[1], [0], [0], [1], [0, 0, 1, 1], [], []>} : vector<8x128xf32>, vector<128x128xf32>, vector<8x128xf32> -> vector<8x128xf32>
    %7 = arith.addf %3, %6 : vector<8x128xf32>
    %c0_6 = arith.constant 0 : index
    %c0_7 = arith.constant 0 : index
    %8 = vector.load %arg6[%c0_6, %c0_7] : memref<8x128xf32, #tpu.memory_space<vmem>>, vector<8x128xf32>
    tpu.vector_store %arg6[%c0_6, %c0_7], %7 {strides = array<i32>} : memref<8x128xf32, #tpu.memory_space<vmem>>, vector<8x128xf32>,
    %c0_i32_8 = arith.constant 0 : i32
    %9 = arith.cmpi eq, %arg2, %c0_i32_8 : i32
    %10 = arith.extui %9 : i1 to i32
    %c0_i32_9 = arith.constant 0 : i32
    %11 = arith.cmpi ne, %10, %c0_i32_9 : i32
    scf.if %11 {
      %c0_10 = arith.constant 0 : index
      %c0_11 = arith.constant 0 : index
      %12 = vector.load %arg6[%c0_10, %c0_11] : memref<8x128xf32, #tpu.memory_space<vmem>>, vector<8x128xf32>
      %c0_12 = arith.constant 0 : index
      %c0_13 = arith.constant 0 : index
      %13 = vector.load %arg5[%c0_12, %c0_13] : memref<1x128xf32, #tpu.memory_space<vmem>>, vector<1x128xf32>
      %14 = vector.broadcast %13 : vector<1x128xf32> to vector<8x128xf32>
      %15 = arith.addf %12, %14 : vector<8x128xf32>
      %c0_14 = arith.constant 0 : index
      %c0_15 = arith.constant 0 : index
      %16 = vector.load %arg6[%c0_14, %c0_15] : memref<8x128xf32, #tpu.memory_space<vmem>>, vector<8x128xf32>
      tpu.vector_store %arg6[%c0_14, %c0_15], %15 {strides = array<i32>} : memref<8x128xf32, #tpu.memory_space<vmem>>, vector<8x128xf32>,
    } else {
    }
    return
  }
  func.func @transform_0(%arg0: i32, %arg1: i32, %arg2: i32) -> (i32, i32) {
    %c0_i32 = arith.constant 0 : i32
    return %arg0, %arg2 : i32, i32
  }
  func.func @transform_1(%arg0: i32, %arg1: i32, %arg2: i32) -> (i32, i32) {
    %c0_i32 = arith.constant 0 : i32
    return %arg2, %arg1 : i32, i32
  }
  func.func @transform_2(%arg0: i32, %arg1: i32, %arg2: i32) -> (i32, i32) {
    %c0_i32 = arith.constant 0 : i32
    %c0_i32_0 = arith.constant 0 : i32
    return %c0_i32, %arg1 : i32, i32
  }
  func.func @transform_3(%arg0: i32, %arg1: i32, %arg2: i32) -> (i32, i32) {
    %c0_i32 = arith.constant 0 : i32
    return %arg0, %arg1 : i32, i32
  }
}

</mosaic_0001>

<llo_original>
// kernel: linear_forward.1
$region0: #{linear_forward.1}
  #allocation0 [shape = 'u32[]', space=smem, size = 0x4, offset = 0x4, fixed_abs, tag = 'smem constant byte address 0x4 - core index']
  #allocation1 [shape = 'u32[72,128]{1,0:T(1,128)}', space=vmem, size = 0x9000, scoped, tag = 'internal scratch']
  %s0 = inlined_call_operand.vmem [shape: f32[16,128], index: 0, kind: input, shape index: {}]
  %s1 = inlined_call_operand.vmem [shape: f32[128,128], index: 1, kind: input, shape index: {}]
  %s2 = inlined_call_operand.vmem [shape: f32[1,128], index: 2, kind: input, shape index: {}]
  %s3 = inlined_call_operand.vmem [shape: f32[16,128], index: 3, kind: output, shape index: {}]
  %s4 = sld [smem:[#allocation0]]
  $region53: #{linear_forward.1} parent=0
    _
  %s6 = ssub.s32 1, %s4
  %s7 = scalar_select 0, %s6, %s4
  loop: start=0, step=1, limit=4
  $region2: #{linear_forward.1} parent=0 // loop_pre_header
    _
  $region3: #{linear_forward.1} parent=0 // loop_header
    %s9 = sphi 0, %s13
    %p10 = scmp.ge.s32.totalorder %s9, 4
    %s16 = sphi 0, %s35
    %s17 = sphi 0, %s31
    %s18 = sphi 0, %s27
    %s19 = sphi 0, %s16
    %s20 = sphi 0, %s17
    %s21 = sphi 0, %s18
    %s22 = sphi 0, %s19
    %s23 = sphi 0, %s20
    %s24 = sphi 0, %s21
    %s40 = sphi 0, %s42
    %s43 = sphi 0, %s40
    %s44 = sphi 0, %s43
    %s60 = sphi 0, %s44
    %s68 = sphi 0, %s70
    %s71 = sphi 0, %s68
    %s72 = sphi 0, %s71
    %s88 = sphi 0, %s72
    %s94 = sphi 0, %s96
    %s97 = sphi 0, %s94
    %s98 = sphi 0, %s97
    %s114 = sphi 0, %s98
    %s122 = sphi 0, %s124
    %s125 = sphi 0, %s122
    %s126 = sphi 0, %s125
    %s142 = sphi 0, %s126
  $region4: #{linear_forward.1} parent=0 // loop_header_branch
    %12 = sbr.rel (%p10) target = $region8
  $region5: #{linear_forward.1} parent=0 // loop_body
    %s14 = ssub.s32 %s9, 1
    %s15 = ssub.s32 %s9, 2
    %s25 = sadd.s32 1, %s18
    %p26 = scmp.ge.s32.totalorder %s25, 1
    %s27 = scalar_select %p26, 0, %s25
    %s28 = sadd.s32 1, %s17
    %s29 = scalar_select %p26, %s28, %s17
    %p30 = scmp.ge.s32.totalorder %s29, 1
    %s31 = scalar_select %p30, 0, %s29
    %s32 = sadd.s32 1, %s16
    %s33 = scalar_select %p30, %s32, %s16
    %p34 = scmp.ge.s32.totalorder %s33, 2
    %s35 = scalar_select %p34, 0, %s33
    %s36 = ssub.s32 %s16, %s35
    %s37 = ssub.s32 %s18, %s27
    %s38 = sor.u32 %s36, %s37
    %p39 = scmp.eq.s32.totalorder %s38, 0
    %s41 = sadd.s32 %s40, 1
    %s42 = scalar_select %p39, %s40, %s41
    %p45 = pneg %p39
    %p46 = scmp.eq.s32.totalorder %s9, 1
    %p47 = por %p45, %p46
    %p48 = scmp.ne.s32.totalorder %s40, %s43
    %p49 = scmp.eq.s32.totalorder %s9, 0
    %p50 = por %p48, %p49
    %p51 = scmp.ne.s32.totalorder %s40, %s43
    %p52 = scmp.eq.s32.totalorder %s14, 1
    %p53 = por %p51, %p52
    %p54 = scmp.ne.s32.totalorder %s43, %s44
    %p55 = scmp.eq.s32.totalorder %s14, 0
    %p56 = por %p54, %p55
    %p57 = scmp.ne.s32.totalorder %s43, %s44
    %p58 = scmp.eq.s32.totalorder %s15, 1
    %p59 = por %p57, %p58
    %p61 = scmp.ne.s32.totalorder %s44, %s60
    %p62 = scmp.eq.s32.totalorder %s15, 0
    %p63 = por %p61, %p62
    %s64 = ssub.s32 %s18, %s27
    %s65 = ssub.s32 %s17, %s31
    %s66 = sor.u32 %s64, %s65
    %p67 = scmp.eq.s32.totalorder %s66, 0
    %s69 = sadd.s32 %s68, 1
    %s70 = scalar_select %p67, %s68, %s69
    %p73 = pneg %p67
    %p74 = scmp.eq.s32.totalorder %s9, 1
    %p75 = por %p73, %p74
    %p76 = scmp.ne.s32.totalorder %s68, %s71
    %p77 = scmp.eq.s32.totalorder %s9, 0
    %p78 = por %p76, %p77
    %p79 = scmp.ne.s32.totalorder %s68, %s71
    %p80 = scmp.eq.s32.totalorder %s14, 1
    %p81 = por %p79, %p80
    %p82 = scmp.ne.s32.totalorder %s71, %s72
    %p83 = scmp.eq.s32.totalorder %s14, 0
    %p84 = por %p82, %p83
    %p85 = scmp.ne.s32.totalorder %s71, %s72
    %p86 = scmp.eq.s32.totalorder %s15, 1
    %p87 = por %p85, %p86
    %p89 = scmp.ne.s32.totalorder %s72, %s88
    %p90 = scmp.eq.s32.totalorder %s15, 0
    %p91 = por %p89, %p90
    %s92 = ssub.s32 %s17, %s31
    %p93 = scmp.eq.s32.totalorder %s92, 0
    %s95 = sadd.s32 %s94, 1
    %s96 = scalar_select %p93, %s94, %s95
    %p99 = pneg %p93
    %p100 = scmp.eq.s32.totalorder %s9, 1
    %p101 = por %p99, %p100
    %p102 = scmp.ne.s32.totalorder %s94, %s97
    %p103 = scmp.eq.s32.totalorder %s9, 0
    %p104 = por %p102, %p103
    %p105 = scmp.ne.s32.totalorder %s94, %s97
    %p106 = scmp.eq.s32.totalorder %s14, 1
    %p107 = por %p105, %p106
    %p108 = scmp.ne.s32.totalorder %s97, %s98
    %p109 = scmp.eq.s32.totalorder %s14, 0
    %p110 = por %p108, %p109
    %p111 = scmp.ne.s32.totalorder %s97, %s98
    %p112 = scmp.eq.s32.totalorder %s15, 1
    %p113 = por %p111, %p112
    %p115 = scmp.ne.s32.totalorder %s98, %s114
    %p116 = scmp.eq.s32.totalorder %s15, 0
    %p117 = por %p115, %p116
    %s118 = ssub.s32 %s16, %s35
    %s119 = ssub.s32 %s17, %s31
    %s120 = sor.u32 %s118, %s119
    %p121 = scmp.eq.s32.totalorder %s120, 0
    %s123 = sadd.s32 %s122, 1
    %s124 = scalar_select %p121, %s122, %s123
    %p127 = pneg %p121
    %p128 = scmp.eq.s32.totalorder %s9, 1
    %p129 = por %p127, %p128
    %p130 = scmp.ne.s32.totalorder %s122, %s125
    %p131 = scmp.eq.s32.totalorder %s9, 0
    %p132 = por %p130, %p131
    %p133 = scmp.ne.s32.totalorder %s122, %s125
    %p134 = scmp.eq.s32.totalorder %s14, 1
    %p135 = por %p133, %p134
    %p136 = scmp.ne.s32.totalorder %s125, %s126
    %p137 = scmp.eq.s32.totalorder %s14, 0
    %p138 = por %p136, %p137
    %p139 = scmp.ne.s32.totalorder %s125, %s126
    %p140 = scmp.eq.s32.totalorder %s15, 1
    %p141 = por %p139, %p140
    %p143 = scmp.ne.s32.totalorder %s126, %s142
    %p144 = scmp.eq.s32.totalorder %s15, 0
    %p145 = por %p143, %p144
    %p146 = scmp.le.s32.totalorder 1, %s9
    %p147 = scmp.lt.s32.totalorder %s9, 3
    %p148 = pnand %p146, %p147
    %p149 = pneg %p148
    // Predicated region
    $region9: #{linear_forward.1} parent=5 // pred_check
      _
    $region10: #{linear_forward.1} parent=5 // pred_check_branch
      %151 = sbr.rel (%p148) target = $region12
    $region11: #{linear_forward.1} parent=5 // pred_region
      %s152 = ssub.s32 %s9, 1
      // Predicated region
      $region13: #{linear_forward.1} parent=11 // pred_check
        %p153 = pneg %p84
      $region14: #{linear_forward.1} parent=11 // pred_check_branch
        %155 = sbr.rel (%p153) target = $region16
      $region15: #{linear_forward.1} parent=11 // pred_region
        %s156 = smul.u32 16, %s21
        %p157 = scmp.lt.s32.totalorder %s156, 15
        %s158 = scalar_select %p157, %s156, 15
        %p159 = scmp.lt.s32.totalorder %s20, 0
        %s160 = scalar_select %p159, %s20, 0
        %s161 = sadd.s32 %s160, %s158
        %s162 = smul.addr %s161, 8
        %s163 = scalar_lea.vmem %s1, %s162
        %s164 = smul.u32 16, %s21
      $region16: #{linear_forward.1} parent=11 // pred_fallthru
        _
      // Predicated region
      $region17: #{linear_forward.1} parent=11 // pred_check
        %p165 = pneg %p110
      $region18: #{linear_forward.1} parent=11 // pred_check_branch
        %167 = sbr.rel (%p165) target = $region20
      $region19: #{linear_forward.1} parent=11 // pred_region
        %p168 = scmp.lt.s32.totalorder %s20, 0
        %s169 = scalar_select %p168, %s20, 0
        %s170 = scalar_lea.vmem %s2, %s169
      $region20: #{linear_forward.1} parent=11 // pred_fallthru
        _
    $region12: #{linear_forward.1} parent=5 // pred_fallthru
      _
    %p171 = scmp.lt.s32.totalorder %s9, 2
    // Predicated region
    $region21: #{linear_forward.1} parent=5 // pred_check
      %p172 = pneg %p171
    $region22: #{linear_forward.1} parent=5 // pred_check_branch
      %174 = sbr.rel (%p172) target = $region24
    $region23: #{linear_forward.1} parent=5 // pred_region
      // Predicated region
      $region25: #{linear_forward.1} parent=23 // pred_check
        %p175 = pneg %p50
      $region26: #{linear_forward.1} parent=23 // pred_check_branch
        %177 = sbr.rel (%p175) target = $region28
      $region27: #{linear_forward.1} parent=23 // pred_region
        %p178 = scmp.lt.s32.totalorder %s16, 1
        %s179 = scalar_select %p178, %s16, 1
        %p180 = scmp.lt.s32.totalorder %s18, 0
        %s181 = scalar_select %p180, %s18, 0
        %s182 = sadd.s32 %s181, %s179
        %s183 = smul.addr %s182, 8
        %s184 = scalar_lea.vmem %s0, %s183
      $region28: #{linear_forward.1} parent=23 // pred_fallthru
        _
    $region24: #{linear_forward.1} parent=5 // pred_fallthru
      _
    %p185 = scmp.le.s32.totalorder 1, %s9
    %p186 = scmp.lt.s32.totalorder %s9, 3
    %p187 = pnand %p185, %p186
    %p188 = pneg %p187
    // Predicated region
    $region29: #{linear_forward.1} parent=5 // pred_check
      _
    $region30: #{linear_forward.1} parent=5 // pred_check_branch
      %190 = sbr.rel (%p187) target = $region32
    $region31: #{linear_forward.1} parent=5 // pred_region
      %s191 = ssub.s32 %s9, 1
      %p192 = scmp.lt.s32.totalorder %s19, 1
      %s193 = scalar_select %p192, %s19, 1
      %p194 = scmp.lt.s32.totalorder %s21, 0
      %s195 = scalar_select %p194, %s21, 0
      %s196 = sadd.s32 %s195, %s193
      %s197 = smul.addr %s196, 8
      %s198 = scalar_lea.vmem %s0, %s197
      %p199 = pneg %p56
      %p200 = pneg %p53
      %s201 = smul.u32 16, %s21
      %p202 = scmp.lt.s32.totalorder %s201, 15
      %s203 = scalar_select %p202, %s201, 15
      %p204 = scmp.lt.s32.totalorder %s20, 0
      %s205 = scalar_select %p204, %s20, 0
      %s206 = sadd.s32 %s205, %s203
      %s207 = smul.addr %s206, 8
      %s208 = scalar_lea.vmem %s1, %s207
      %p209 = pneg %p84
      %p210 = pneg %p81
      %p211 = scmp.lt.s32.totalorder %s20, 0
      %s212 = scalar_select %p211, %s20, 0
      %s213 = scalar_lea.vmem %s2, %s212
      %p214 = pneg %p110
      %p215 = pneg %p107
      %p216 = pneg %p138
      %p217 = pneg %p135
      %p218 = scmp.lt.s32.totalorder %s19, 1
      %s219 = scalar_select %p218, %s19, 1
      %p220 = scmp.lt.s32.totalorder %s20, 0
      %s221 = scalar_select %p220, %s20, 0
      %s222 = sadd.s32 %s221, %s219
      %s223 = smul.addr %s222, 8
      %s224 = scalar_lea.vmem %s3, %s223
      %p225 = scmp.lt.s32.totalorder %s19, 1
      %s226 = scalar_select %p225, %s19, 1
      %p227 = scmp.lt.s32.totalorder %s21, 0
      %s228 = scalar_select %p227, %s21, 0
      %s229 = sadd.s32 %s228, %s226
      %s230 = smul.addr %s229, 8
      %s231 = scalar_lea.vmem %s0, %s230
      %s232 = smul.u32 16, %s21
      %p233 = scmp.lt.s32.totalorder %s232, 15
      %s234 = scalar_select %p233, %s232, 15
      %p235 = scmp.lt.s32.totalorder %s20, 0
      %s236 = scalar_select %p235, %s20, 0
      %s237 = sadd.s32 %s236, %s234
      %s238 = smul.addr %s237, 8
      %s239 = scalar_lea.vmem %s1, %s238
      %s240 = smul.u32 16, %s21
      %p241 = scmp.lt.s32.totalorder %s20, 0
      %s242 = scalar_select %p241, %s20, 0
      %s243 = scalar_lea.vmem %s2, %s242
      %p244 = scmp.lt.s32.totalorder %s19, 1
      %s245 = scalar_select %p244, %s19, 1
      %p246 = scmp.lt.s32.totalorder %s20, 0
      %s247 = scalar_select %p246, %s20, 0
      %s248 = sadd.s32 %s247, %s245
      %s249 = smul.addr %s248, 8
      %s250 = scalar_lea.vmem %s3, %s249
      %p251 = scmp.eq.s32.totalorder %s21, 0
      // Predicated region
      $region33: #{linear_forward.1} parent=31 // pred_check
        %p252 = pneg %p251
      $region34: #{linear_forward.1} parent=31 // pred_check_branch
        %254 = sbr.rel (%p252) target = $region36
      $region35: #{linear_forward.1} parent=31 // pred_region
        %255 = vst [vmem:[%s250] sm:$0xff] 0.0
      $region36: #{linear_forward.1} parent=31 // pred_fallthru
        _
      %v256 = vld [vmem:[%s250] sm:$0xff]
      %v257 = vld [vmem:[%s231] sm:$0xff]
      %v258 = vld [vmem:[%s239] sm:$0xff]
      %v259 = vld [vmem:[%s239 + $0x8] sm:$0xff]
      %v260 = vld [vmem:[%s239 + $0x10] sm:$0xff]
      %v261 = vld [vmem:[%s239 + $0x18] sm:$0xff]
      %v262 = vld [vmem:[%s239 + $0x20] sm:$0xff]
      %v263 = vld [vmem:[%s239 + $0x28] sm:$0xff]
      %v264 = vld [vmem:[%s239 + $0x30] sm:$0xff]
      %v265 = vld [vmem:[%s239 + $0x38] sm:$0xff]
      %v266 = vld [vmem:[%s239 + $0x40] sm:$0xff]
      %v267 = vld [vmem:[%s239 + $0x48] sm:$0xff]
      %v268 = vld [vmem:[%s239 + $0x50] sm:$0xff]
      %v269 = vld [vmem:[%s239 + $0x58] sm:$0xff]
      %v270 = vld [vmem:[%s239 + $0x60] sm:$0xff]
      %v271 = vld [vmem:[%s239 + $0x68] sm:$0xff]
      %v272 = vld [vmem:[%s239 + $0x70] sm:$0xff]
      %v273 = vld [vmem:[%s239 + $0x78] sm:$0xff]
      %274 = vmatpush.msra.mxu0 %v273
      %275 = vmatpush.msra.mxu0 %v272
      %276 = vmatpush.msra.mxu0 %v271
      %277 = vmatpush.msra.mxu0 %v270
      %278 = vmatpush.msra.mxu0 %v269
      %279 = vmatpush.msra.mxu0 %v268
      %280 = vmatpush.msra.mxu0 %v267
      %281 = vmatpush.msra.mxu0 %v266
      %282 = vmatpush.msra.mxu0 %v265
      %283 = vmatpush.msra.mxu0 %v264
      %284 = vmatpush.msra.mxu0 %v263
      %285 = vmatpush.msra.mxu0 %v262
      %286 = vmatpush.msra.mxu0 %v261
      %287 = vmatpush.msra.mxu0 %v260
      %288 = vmatpush.msra.mxu0 %v259
      %289 = vmatpush.msra.mxu0 %v258
      %290 = vmatmul.f32.gmra.mxu0 %v257
      %v291 = vpop.f32.mrf.mxu0
      %v292 = vadd.f32 0.0, %v291
      %293 = vdwg.mxu0
      %v294 = vadd.f32 %v256, %v292
      %295 = vst [vmem:[%s250] sm:$0xff] %v294
      // Predicated region
      $region37: #{linear_forward.1} parent=31 // pred_check
        %p296 = pneg %p251
      $region38: #{linear_forward.1} parent=31 // pred_check_branch
        %298 = sbr.rel (%p296) target = $region40
      $region39: #{linear_forward.1} parent=31 // pred_region
        %v299 = vld [vmem:[%s250] sm:$0xff]
        %v300 = vld [vmem:[%s243] sm:$0x1]
        %v302 = vperm.slane %v300, 0
        %v304 = vadd.f32 %v299, %v302
        %305 = vst [vmem:[%s250] sm:$0xff] %v304
      $region40: #{linear_forward.1} parent=31 // pred_fallthru
        _
      %p306 = scmp.lt.s32.totalorder %s19, 1
      %s307 = scalar_select %p306, %s19, 1
      %p308 = scmp.lt.s32.totalorder %s20, 0
      %s309 = scalar_select %p308, %s20, 0
      %s310 = sadd.s32 %s309, %s307
      %s311 = smul.addr %s310, 8
      %s312 = scalar_lea.vmem %s3, %s311
      // Predicated region
      $region41: #{linear_forward.1} parent=31 // pred_check
        %p313 = pneg %p135
      $region42: #{linear_forward.1} parent=31 // pred_check_branch
        %315 = sbr.rel (%p313) target = $region44
      $region43: #{linear_forward.1} parent=31 // pred_region
        _
      $region44: #{linear_forward.1} parent=31 // pred_fallthru
        _
    $region32: #{linear_forward.1} parent=5 // pred_fallthru
      _
    %p316 = scmp.le.s32.totalorder 2, %s9
    // Predicated region
    $region45: #{linear_forward.1} parent=5 // pred_check
      %p317 = pneg %p316
    $region46: #{linear_forward.1} parent=5 // pred_check_branch
      %319 = sbr.rel (%p317) target = $region48
    $region47: #{linear_forward.1} parent=5 // pred_region
      %s320 = ssub.s32 %s9, 2
      // Predicated region
      $region49: #{linear_forward.1} parent=47 // pred_check
        %p321 = pneg %p141
      $region50: #{linear_forward.1} parent=47 // pred_check_branch
        %323 = sbr.rel (%p321) target = $region52
      $region51: #{linear_forward.1} parent=47 // pred_region
        %p324 = scmp.lt.s32.totalorder %s22, 1
        %s325 = scalar_select %p324, %s22, 1
        %p326 = scmp.lt.s32.totalorder %s23, 0
        %s327 = scalar_select %p326, %s23, 0
        %s328 = sadd.s32 %s327, %s325
        %s329 = smul.addr %s328, 8
        %s330 = scalar_lea.vmem %s3, %s329
      $region52: #{linear_forward.1} parent=47 // pred_fallthru
        _
    $region48: #{linear_forward.1} parent=5 // pred_fallthru
      _
  $region6: #{linear_forward.1} parent=0 // loop_footer
    %s13 = sadd.s32 1, %s9
  $region7: #{linear_forward.1} parent=0 // loop_footer_branch
    %8 = sbr.rel target = $region3
  $region8: #{linear_forward.1} parent=0 // loop_exit
    _

</llo_original>
